<compile_context>
chip_gen: v7x
topology: tpu7x:2x2x1
jax: 0.10.0
libtpu: 0.0.40
codegen_flags: <defaults>
</compile_context>

<pallas_src>
import jax
import jax.numpy as jnp
from jax.experimental import pallas as pl
from jax.experimental.pallas import tpu as pltpu


def _round_up(v, m):
    return ((v + m - 1) // m) * m


def _attention_kernel(x_ref, wt_ref, b_ref, q_ref, o_ref):
    # x_ref : (TB, N, D)   batch tile of input vectors (stream dtype)
    # wt_ref: (D, QP)      linear weight, transposed, zero-padded to QP lanes
    # b_ref : (1, QP)      linear bias, zero-padded (f32)
    # q_ref : (1, QP)      query vector, zero-padded (f32)
    # o_ref : (TB, D) or (TB*D//128, 128)  pooled outputs (one slab per step)
    tb, n, d = x_ref.shape
    qp = wt_ref.shape[1]

    x = x_ref[...]                                   # (TB, N, D)
    wt = wt_ref[...]                                 # (D, QP)
    bias = b_ref[...]                                # (1, QP) f32
    query = q_ref[...]                               # (1, QP) f32

    # One MXU matmul over the whole tile, f32 accumulation.
    x2 = x.reshape(tb * n, d)
    proj = jnp.tanh(
        jnp.dot(x2, wt, preferred_element_type=jnp.float32) + bias
    )                                                # (TB*N, QP) f32

    # Scores: lane-reduce against the (zero-padded) query -> (TB, N, 1).
    # Padded lanes contribute exactly 0 (query padding is 0).
    scores = jnp.sum(
        proj.reshape(tb, n, qp) * query, axis=-1, keepdims=True
    )                                                # (TB, N, 1) f32

    # Numerically-stable softmax over the N axis, batched over TB.
    m = jnp.max(scores, axis=1, keepdims=True)       # (TB, 1, 1)
    e = jnp.exp(scores - m)                          # (TB, N, 1)
    denom = jnp.sum(e, axis=1, keepdims=True)        # (TB, 1, 1)
    w = e / denom                                    # exact divide (mem-bound)

    # Weighted pooling over N -> (TB, D), f32 accumulation.
    pooled = jnp.sum(w * x.astype(jnp.float32), axis=1)

    # Single slab store; reshape handles the optional lane-dense packing.
    o_ref[...] = pooled.reshape(o_ref.shape).astype(o_ref.dtype)


def attention_forward(x, w, b, q, *, block_b=None, stream_dtype=None):
    """
    Args:
      x: (B, N, D) float32   -- batch_size, n_input_vector, input_vector_dim
      w: (Q, D) linear weight (PyTorch nn.Linear layout)
      b: (Q,)   linear bias
      q: (Q,)   query vector
      block_b: optional batch tile override.
      stream_dtype: optional narrow dtype (e.g. jnp.bfloat16 on v6e/v7x) for
        the bandwidth-dominant x/W streams; compute stays in f32.
    Returns:
      (B, D) in x.dtype
    """
    B, N, D = x.shape
    Q = q.shape[0]
    out_dtype = x.dtype
    sdt = out_dtype if stream_dtype is None else stream_dtype

    # Pad the query dimension to full 128-lane tiles.  Bias/query padding is
    # 0, so padded lanes contribute exactly nothing to the scores.
    QP = _round_up(max(Q, 1), 128)
    wt = jnp.zeros((D, QP), sdt).at[:, :Q].set(w.T.astype(sdt))
    b2 = jnp.zeros((1, QP), jnp.float32).at[:, :Q].set(b.astype(jnp.float32))
    q2 = jnp.zeros((1, QP), jnp.float32).at[:, :Q].set(q.astype(jnp.float32))

    x_stream = x.astype(sdt)
    itemsize = jnp.dtype(sdt).itemsize
    per_batch = max(1, N * D * itemsize)

    if block_b is None:
        # ~2 MiB of x per grid step amortizes the ~0.35 us per-step overhead;
        # double-buffered x capped at ~8 MiB keeps us well under the default
        # scoped VMEM limit on every generation (16 MiB v5e, 32 MiB v6e/v7x).
        bytes_target = 2 << 20
        vmem_budget = 8 << 20
        tb = _round_up(
            max(bytes_target // per_batch, pl.cdiv(256, max(N, 1)), 8), 8
        )
        tb_vmem = max(8, ((vmem_budget // (2 * per_batch)) // 8) * 8)
        tb = min(tb, tb_vmem)
        bp8 = _round_up(B, 8)
        # Keep >= 2 grid steps when the batch allows it, so the "parallel"
        # batch axis can shard across both v7x TensorCores.
        if bp8 >= 16:
            tb = min(tb, _round_up(pl.cdiv(bp8, 2), 8))
        block_b = int(max(8, min(tb, bp8)))

    # Pad the batch so it divides the tile; padded rows are zeros (finite
    # scores -> uniform softmax -> zero output) and are sliced off below.
    Bp = _round_up(B, block_b)
    if Bp != B:
        x_stream = jnp.pad(x_stream, ((0, Bp - B), (0, 0), (0, 0)))

    # Lane-dense output packing: 128/D batch rows per 128-lane output row,
    # whenever the per-step output slab tiles cleanly into (8, 128) blocks.
    pack = (D < 128) and (128 % D == 0) and ((block_b * D) % (8 * 128) == 0)
    if pack:
        out_shape = jax.ShapeDtypeStruct((Bp * D // 128, 128), out_dtype)
        out_spec = pl.BlockSpec((block_b * D // 128, 128), lambda i: (i, 0))
    else:
        out_shape = jax.ShapeDtypeStruct((Bp, D), out_dtype)
        out_spec = pl.BlockSpec((block_b, D), lambda i: (i, 0))

    out = pl.pallas_call(
        _attention_kernel,
        out_shape=out_shape,
        grid_spec=pltpu.PrefetchScalarGridSpec(
            num_scalar_prefetch=0,
            grid=(Bp // block_b,),
            in_specs=[
                pl.BlockSpec((block_b, N, D), lambda i: (i, 0, 0)),
                pl.BlockSpec((D, QP), lambda i: (0, 0)),
                pl.BlockSpec((1, QP), lambda i: (0, 0)),
                pl.BlockSpec((1, QP), lambda i: (0, 0)),
            ],
            out_specs=out_spec,
        ),
        compiler_params=pltpu.CompilerParams(
            dimension_semantics=("parallel",),
        ),
    )(x_stream, wt, b2, q2)

    if pack:
        out = out.reshape(Bp, D)
    return out[:B]


def attention_ref(x, w, b, q):
    """Pure-JAX reference matching the PyTorch module."""
    tmp = jnp.tanh(jnp.einsum("bnd,qd->bnq", x, w) + b)     # (B, N, Q)
    scores = jnp.einsum("bnq,q->bn", tmp, q)                # (B, N)
    weight = jax.nn.softmax(scores, axis=1)                 # (B, N)
    return jnp.einsum("bn,bnd->bd", weight, x)              # (B, D)


if __name__ == "__main__":
    # Small shapes consistent with the module's forward contract.
    # B=16 gives a 2-step grid with the default block_b=8 batch tile.
    B, N, D, Q = 16, 8, 32, 16

    key = jax.random.PRNGKey(0)
    kx, kw, kb, kq = jax.random.split(key, 4)

    x = jax.random.normal(kx, (B, N, D), dtype=jnp.float32)
    w = jax.random.uniform(kw, (Q, D), minval=-0.1, maxval=0.1, dtype=jnp.float32)
    b = jax.random.uniform(kb, (Q,), minval=-0.1, maxval=0.1, dtype=jnp.float32)
    q = jax.random.uniform(kq, (Q,), minval=-0.1, maxval=0.1, dtype=jnp.float32)

    out = attention_forward(x, w, b, q)
    out = jax.block_until_ready(out)

    ref = attention_ref(x, w, b, q)
    assert out.shape == (B, D)
    assert jnp.allclose(out, ref, atol=1e-4, rtol=1e-4), (
        f"max abs err {jnp.max(jnp.abs(out - ref))}"
    )
    print("KERNEL_OK")
</pallas_src>

<mosaic_0001>
module attributes {stable_mosaic.version = 11 : i64} {
  func.func @_attention_kernel(%arg0: i32, %arg1: memref<8x8x32xf32, #tpu.memory_space<vmem>>, %arg2: memref<32x128xf32, #tpu.memory_space<vmem>>, %arg3: memref<1x128xf32, #tpu.memory_space<vmem>>, %arg4: memref<1x128xf32, #tpu.memory_space<vmem>>, %arg5: memref<8x32xf32, #tpu.memory_space<vmem>>) attributes {dimension_semantics = [#tpu.dimension_semantics<parallel>], iteration_bounds = array<i64: 2>, scalar_prefetch = 0 : i64, scratch_operands = 0 : i64, tpu.core_type = #tpu.core_type<tc>, window_params = [{transform_indices = @transform_0, window_bounds = array<i64: 8, 8, 32>}, {pipeline_mode = #tpu.pipeline_mode<synchronous>, transform_indices = @transform_1, window_bounds = array<i64: 32, 128>}, {pipeline_mode = #tpu.pipeline_mode<synchronous>, transform_indices = @transform_2, window_bounds = array<i64: 1, 128>}, {pipeline_mode = #tpu.pipeline_mode<synchronous>, transform_indices = @transform_3, window_bounds = array<i64: 1, 128>}, {transform_indices = @transform_4, window_bounds = array<i64: 8, 32>}]} {
    %c0 = arith.constant 0 : index
    %c0_0 = arith.constant 0 : index
    %c0_1 = arith.constant 0 : index
    %0 = vector.load %arg1[%c0, %c0_0, %c0_1] : memref<8x8x32xf32, #tpu.memory_space<vmem>>, vector<8x8x32xf32>
    %c0_2 = arith.constant 0 : index
    %c0_3 = arith.constant 0 : index
    %1 = vector.load %arg2[%c0_2, %c0_3] : memref<32x128xf32, #tpu.memory_space<vmem>>, vector<32x128xf32>
    %c0_4 = arith.constant 0 : index
    %c0_5 = arith.constant 0 : index
    %2 = vector.load %arg3[%c0_4, %c0_5] : memref<1x128xf32, #tpu.memory_space<vmem>>, vector<1x128xf32>
    %c0_6 = arith.constant 0 : index
    %c0_7 = arith.constant 0 : index
    %3 = vector.load %arg4[%c0_6, %c0_7] : memref<1x128xf32, #tpu.memory_space<vmem>>, vector<1x128xf32>
    %4 = vector.shape_cast %0 : vector<8x8x32xf32> to vector<64x32xf32>
    %cst = arith.constant dense<0.000000e+00> : vector<64x128xf32>
    %5 = tpu.matmul %4, %1, %cst {dimension_numbers = #tpu.dot_dimension_numbers<[1], [0], [0], [1], [0, 0, 1, 1], [], []>} : vector<64x32xf32>, vector<32x128xf32>, vector<64x128xf32> -> vector<64x128xf32>
    %6 = vector.broadcast %2 : vector<1x128xf32> to vector<64x128xf32>
    %7 = arith.addf %5, %6 : vector<64x128xf32>
    %8 = math.tanh %7 : vector<64x128xf32>
    %9 = vector.shape_cast %8 : vector<64x128xf32> to vector<8x8x128xf32>
    %10 = vector.shape_cast %3 : vector<1x128xf32> to vector<1x1x128xf32>
    %11 = vector.broadcast %10 : vector<1x1x128xf32> to vector<8x8x128xf32>
    %12 = arith.mulf %9, %11 : vector<8x8x128xf32>
    %cst_8 = arith.constant dense<0.000000e+00> : vector<8x8xf32>
    %13 = vector.multi_reduction <add>, %12, %cst_8 [2] : vector<8x8x128xf32> to vector<8x8xf32>
    %14 = vector.shape_cast %13 : vector<8x8xf32> to vector<8x8x1xf32>
    %cst_9 = arith.constant dense<0xFF800000> : vector<8x1xf32>
    %15 = vector.multi_reduction <maximumf>, %14, %cst_9 [1] : vector<8x8x1xf32> to vector<8x1xf32>
    %16 = vector.shape_cast %15 : vector<8x1xf32> to vector<8x1x1xf32>
    %17 = vector.broadcast %16 : vector<8x1x1xf32> to vector<8x8x1xf32>
    %18 = arith.subf %14, %17 : vector<8x8x1xf32>
    %19 = math.exp %18 : vector<8x8x1xf32>
    %cst_10 = arith.constant dense<0.000000e+00> : vector<8x1xf32>
    %20 = vector.multi_reduction <add>, %19, %cst_10 [1] : vector<8x8x1xf32> to vector<8x1xf32>
    %21 = vector.shape_cast %20 : vector<8x1xf32> to vector<8x1x1xf32>
    %22 = vector.broadcast %21 : vector<8x1x1xf32> to vector<8x8x1xf32>
    %23 = arith.divf %19, %22 : vector<8x8x1xf32>
    %24 = vector.broadcast %23 : vector<8x8x1xf32> to vector<8x8x32xf32>
    %25 = arith.mulf %24, %0 : vector<8x8x32xf32>
    %cst_11 = arith.constant dense<0.000000e+00> : vector<8x32xf32>
    %26 = vector.multi_reduction <add>, %25, %cst_11 [1] : vector<8x8x32xf32> to vector<8x32xf32>
    %c0_12 = arith.constant 0 : index
    %c0_13 = arith.constant 0 : index
    %27 = vector.load %arg5[%c0_12, %c0_13] : memref<8x32xf32, #tpu.memory_space<vmem>>, vector<8x32xf32>
    tpu.vector_store %arg5[%c0_12, %c0_13], %26 {strides = array<i32>} : memref<8x32xf32, #tpu.memory_space<vmem>>, vector<8x32xf32>,
    return
  }
  func.func @transform_0(%arg0: i32) -> (i32, i32, i32) {
    %c0_i32 = arith.constant 0 : i32
    %c0_i32_0 = arith.constant 0 : i32
    %c0_i32_1 = arith.constant 0 : i32
    return %arg0, %c0_i32, %c0_i32_0 : i32, i32, i32
  }
  func.func @transform_1(%arg0: i32) -> (i32, i32) {
    %c0_i32 = arith.constant 0 : i32
    %c0_i32_0 = arith.constant 0 : i32
    %c0_i32_1 = arith.constant 0 : i32
    return %c0_i32, %c0_i32_0 : i32, i32
  }
  func.func @transform_2(%arg0: i32) -> (i32, i32) {
    %c0_i32 = arith.constant 0 : i32
    %c0_i32_0 = arith.constant 0 : i32
    %c0_i32_1 = arith.constant 0 : i32
    return %c0_i32, %c0_i32_0 : i32, i32
  }
  func.func @transform_3(%arg0: i32) -> (i32, i32) {
    %c0_i32 = arith.constant 0 : i32
    %c0_i32_0 = arith.constant 0 : i32
    %c0_i32_1 = arith.constant 0 : i32
    return %c0_i32, %c0_i32_0 : i32, i32
  }
  func.func @transform_4(%arg0: i32) -> (i32, i32) {
    %c0_i32 = arith.constant 0 : i32
    %c0_i32_0 = arith.constant 0 : i32
    return %arg0, %c0_i32 : i32, i32
  }
}

</mosaic_0001>

<llo_original>
// kernel: tpu_custom_call.1
$region0: #{tpu_custom_call.1}
  #allocation0 [shape = 'u32[]', space=smem, size = 0x4, offset = 0x4, fixed_abs, tag = 'smem constant byte address 0x4 - core index']
  #allocation1 [shape = 'u32[144,128]{1,0:T(1,128)}', space=vmem, size = 0x12000, scoped, tag = 'internal scratch']
  %s0 = inlined_call_operand.hbm [shape: f32[16,8,32], index: 0, kind: input, shape index: {}]
  %s1 = inlined_call_operand.hbm [shape: f32[32,128], index: 1, kind: input, shape index: {}]
  %s2 = inlined_call_operand.vmem [shape: f32[1,128], index: 2, kind: input, shape index: {}]
  %s3 = inlined_call_operand.vmem [shape: f32[1,128], index: 3, kind: input, shape index: {}]
  %s4 = inlined_call_operand.hbm [shape: f32[16,32], index: 4, kind: output, shape index: {}]
  %s5 = sld [smem:[#allocation0]]
  $region57: #{tpu_custom_call.1} parent=0
    _
  %s7 = ssub.s32 1, %s5
  %s8 = scalar_select 0, %s7, %s5
  $region1: #{tpu_custom_call.1} parent=0
    #allocation2 [shape = 'u8[65536]{0}', space=vmem, size = 0x10000, scoped, tag = 'input window, operand 0']
    #allocation3 [shape = 's32[2]{0}', space=sflag, size = 0x8, scoped, tag = 'scoped memory for tpu_custom_call.1']
    #allocation4 [shape = 's32[2]{0}', space=sflag, size = 0x8, scoped, tag = 'scoped memory for tpu_custom_call.1']
    #allocation5 [shape = 'u8[16384]{0}', space=vmem, size = 0x4000, scoped, tag = 'input window, operand 1, single buffered']
    #allocation6 [shape = 's32[1]{0}', space=sflag, size = 0x4, scoped, tag = 'scoped memory for tpu_custom_call.1']
    #allocation7 [shape = 'u8[8192]{0}', space=vmem, size = 0x2000, scoped, tag = 'output window, operand 0']
    %9 = vsyncpa [#allocation3], 0
    %s10 = scalar_lea.sflag [#allocation3], 1
    %11 = vsyncpa %s10, 0
    %12 = vsyncpa [#allocation6], 0
    %13 = vsyncpa [#allocation4], 0
    %s14 = scalar_lea.sflag [#allocation4], 1
    %15 = vsyncpa %s14, 0
    loop: start=0, step=1, limit=4
    $region2: #{tpu_custom_call.1} parent=1 // loop_pre_header
      _
    $region3: #{tpu_custom_call.1} parent=1 // loop_header
      %s17 = sphi 0, %s21
      %p18 = scmp.ge.s32.totalorder %s17, 4
      %s27 = sphi 0, %s29
      %s30 = sphi 0, %s27
      %s31 = sphi 0, %s30
      %s47 = sphi 0, %s31
      %s51 = sphi 0, %s51
      %s53 = sphi 0, %s51
      %s54 = sphi 0, %s53
      %s68 = sphi 0, %s54
      %s72 = sphi 0, %s72
      %s74 = sphi 0, %s72
      %s75 = sphi 0, %s74
      %s89 = sphi 0, %s75
      %s93 = sphi 0, %s93
      %s95 = sphi 0, %s93
      %s96 = sphi 0, %s95
      %s110 = sphi 0, %s96
      %s116 = sphi 0, %s118
      %s119 = sphi 0, %s116
      %s120 = sphi 0, %s119
      %s136 = sphi 0, %s120
    $region4: #{tpu_custom_call.1} parent=1 // loop_header_branch
      %20 = sbr.rel (%p18) target = $region8
    $region5: #{tpu_custom_call.1} parent=1 // loop_body
      %s22 = ssub.s32 %s17, 1
      %s23 = ssub.s32 %s17, 2
      %s24 = sadd.s32 %s17, 1
      %s25 = ssub.s32 %s17, %s24
      %p26 = scmp.eq.s32.totalorder %s25, 0
      %s28 = sadd.s32 %s27, 1
      %s29 = scalar_select %p26, %s27, %s28
      %p32 = pneg %p26
      %p33 = scmp.eq.s32.totalorder %s17, 1
      %p34 = por %p32, %p33
      %p35 = scmp.ne.s32.totalorder %s27, %s30
      %p36 = scmp.eq.s32.totalorder %s17, 0
      %p37 = por %p35, %p36
      %p38 = scmp.ne.s32.totalorder %s27, %s30
      %p39 = scmp.eq.s32.totalorder %s22, 1
      %p40 = por %p38, %p39
      %p41 = scmp.ne.s32.totalorder %s30, %s31
      %p42 = scmp.eq.s32.totalorder %s22, 0
      %p43 = por %p41, %p42
      %p44 = scmp.ne.s32.totalorder %s30, %s31
      %p45 = scmp.eq.s32.totalorder %s23, 1
      %p46 = por %p44, %p45
      %p48 = scmp.ne.s32.totalorder %s31, %s47
      %p49 = scmp.eq.s32.totalorder %s23, 0
      %p50 = por %p48, %p49
      %s52 = sadd.s32 %s51, 1
      %p55 = scmp.eq.s32.totalorder %s17, 1
      %p56 = scmp.ne.s32.totalorder %s51, %s53
      %p57 = scmp.eq.s32.totalorder %s17, 0
      %p58 = por %p56, %p57
      %p59 = scmp.ne.s32.totalorder %s51, %s53
      %p60 = scmp.eq.s32.totalorder %s22, 1
      %p61 = por %p59, %p60
      %p62 = scmp.ne.s32.totalorder %s53, %s54
      %p63 = scmp.eq.s32.totalorder %s22, 0
      %p64 = por %p62, %p63
      %p65 = scmp.ne.s32.totalorder %s53, %s54
      %p66 = scmp.eq.s32.totalorder %s23, 1
      %p67 = por %p65, %p66
      %p69 = scmp.ne.s32.totalorder %s54, %s68
      %p70 = scmp.eq.s32.totalorder %s23, 0
      %p71 = por %p69, %p70
      %s73 = sadd.s32 %s72, 1
      %p76 = scmp.eq.s32.totalorder %s17, 1
      %p77 = scmp.ne.s32.totalorder %s72, %s74
      %p78 = scmp.eq.s32.totalorder %s17, 0
      %p79 = por %p77, %p78
      %p80 = scmp.ne.s32.totalorder %s72, %s74
      %p81 = scmp.eq.s32.totalorder %s22, 1
      %p82 = por %p80, %p81
      %p83 = scmp.ne.s32.totalorder %s74, %s75
      %p84 = scmp.eq.s32.totalorder %s22, 0
      %p85 = por %p83, %p84
      %p86 = scmp.ne.s32.totalorder %s74, %s75
      %p87 = scmp.eq.s32.totalorder %s23, 1
      %p88 = por %p86, %p87
      %p90 = scmp.ne.s32.totalorder %s75, %s89
      %p91 = scmp.eq.s32.totalorder %s23, 0
      %p92 = por %p90, %p91
      %s94 = sadd.s32 %s93, 1
      %p97 = scmp.eq.s32.totalorder %s17, 1
      %p98 = scmp.ne.s32.totalorder %s93, %s95
      %p99 = scmp.eq.s32.totalorder %s17, 0
      %p100 = por %p98, %p99
      %p101 = scmp.ne.s32.totalorder %s93, %s95
      %p102 = scmp.eq.s32.totalorder %s22, 1
      %p103 = por %p101, %p102
      %p104 = scmp.ne.s32.totalorder %s95, %s96
      %p105 = scmp.eq.s32.totalorder %s22, 0
      %p106 = por %p104, %p105
      %p107 = scmp.ne.s32.totalorder %s95, %s96
      %p108 = scmp.eq.s32.totalorder %s23, 1
      %p109 = por %p107, %p108
      %p111 = scmp.ne.s32.totalorder %s96, %s110
      %p112 = scmp.eq.s32.totalorder %s23, 0
      %p113 = por %p111, %p112
      %s114 = ssub.s32 %s17, %s24
      %p115 = scmp.eq.s32.totalorder %s114, 0
      %s117 = sadd.s32 %s116, 1
      %s118 = scalar_select %p115, %s116, %s117
      %p121 = pneg %p115
      %p122 = scmp.eq.s32.totalorder %s17, 1
      %p123 = por %p121, %p122
      %p124 = scmp.ne.s32.totalorder %s116, %s119
      %p125 = scmp.eq.s32.totalorder %s17, 0
      %p126 = por %p124, %p125
      %p127 = scmp.ne.s32.totalorder %s116, %s119
      %p128 = scmp.eq.s32.totalorder %s22, 1
      %p129 = por %p127, %p128
      %p130 = scmp.ne.s32.totalorder %s119, %s120
      %p131 = scmp.eq.s32.totalorder %s22, 0
      %p132 = por %p130, %p131
      %p133 = scmp.ne.s32.totalorder %s119, %s120
      %p134 = scmp.eq.s32.totalorder %s23, 1
      %p135 = por %p133, %p134
      %p137 = scmp.ne.s32.totalorder %s120, %s136
      %p138 = scmp.eq.s32.totalorder %s23, 0
      %p139 = por %p137, %p138
      %p140 = scmp.le.s32.totalorder 1, %s17
      %p141 = scmp.lt.s32.totalorder %s17, 3
      %p142 = pnand %p140, %p141
      %p143 = pneg %p142
      // Predicated region
      $region9: #{tpu_custom_call.1} parent=5 // pred_check
        _
      $region10: #{tpu_custom_call.1} parent=5 // pred_check_branch
        %145 = sbr.rel (%p142) target = $region12
      $region11: #{tpu_custom_call.1} parent=5 // pred_region
        %s146 = ssub.s32 %s17, 1
        // Predicated region
        $region13: #{tpu_custom_call.1} parent=11 // pred_check
          %p147 = pneg %p64
        $region14: #{tpu_custom_call.1} parent=11 // pred_check_branch
          %149 = sbr.rel (%p147) target = $region16
        $region15: #{tpu_custom_call.1} parent=11 // pred_region
          %s151 = ssub.s32 512, 512
          %152 = vsyncadd [#allocation6], %s151
          %s153 = sshll.u32 [#allocation5], 4
          %s154 = int_to_ptr.vmem [resolvable:$true] %s153
          %159 = dma.hbm_to_vmem [thread:$0]  %s1, 512, %s154, [#allocation6], 128, 128, 8
        $region16: #{tpu_custom_call.1} parent=11 // pred_fallthru
          _
        // Predicated region
        $region17: #{tpu_custom_call.1} parent=11 // pred_check
          %p160 = pneg %p85
        $region18: #{tpu_custom_call.1} parent=11 // pred_check_branch
          %162 = sbr.rel (%p160) target = $region20
        $region19: #{tpu_custom_call.1} parent=11 // pred_region
          _
        $region20: #{tpu_custom_call.1} parent=11 // pred_fallthru
          _
        // Predicated region
        $region21: #{tpu_custom_call.1} parent=11 // pred_check
          %p163 = pneg %p106
        $region22: #{tpu_custom_call.1} parent=11 // pred_check_branch
          %165 = sbr.rel (%p163) target = $region24
        $region23: #{tpu_custom_call.1} parent=11 // pred_region
          _
        $region24: #{tpu_custom_call.1} parent=11 // pred_fallthru
          _
      $region12: #{tpu_custom_call.1} parent=5 // pred_fallthru
        _
      %p166 = scmp.lt.s32.totalorder %s17, 2
      // Predicated region
      $region25: #{tpu_custom_call.1} parent=5 // pred_check
        %p167 = pneg %p166
      $region26: #{tpu_custom_call.1} parent=5 // pred_check_branch
        %169 = sbr.rel (%p167) target = $region28
      $region27: #{tpu_custom_call.1} parent=5 // pred_region
        // Predicated region
        $region29: #{tpu_custom_call.1} parent=27 // pred_check
          %p170 = pneg %p37
        $region30: #{tpu_custom_call.1} parent=27 // pred_check_branch
          %172 = sbr.rel (%p170) target = $region32
        $region31: #{tpu_custom_call.1} parent=27 // pred_region
          %s173 = sand.u32 %s27, 1
          %s174 = scalar_lea.sflag [#allocation3], %s173
          %s175 = sand.u32 %s27, 1
          %s176 = smul.addr %s175, 64
          %s177 = scalar_lea.vmem [#allocation2], %s176
          %s178 = smul.u32 8, %s17
          %s180 = ssub.s32 1024, 1024
          %181 = vsyncadd %s174, %s180
          %s182 = smul.addr %s178, 128
          %s183 = scalar_lea.hbm %s0, %s182
          %s184 = sshll.u32 %s177, 4
          %s185 = int_to_ptr.vmem [resolvable:$true] %s184
          %190 = dma.hbm_to_vmem [thread:$0]  %s183, 1024, %s185, %s174, 128, 128, 8
        $region32: #{tpu_custom_call.1} parent=27 // pred_fallthru
          _
      $region28: #{tpu_custom_call.1} parent=5 // pred_fallthru
        _
      %p191 = scmp.le.s32.totalorder 1, %s17
      %p192 = scmp.lt.s32.totalorder %s17, 3
      %p193 = pnand %p191, %p192
      %p194 = pneg %p193
      // Predicated region
      $region33: #{tpu_custom_call.1} parent=5 // pred_check
        _
      $region34: #{tpu_custom_call.1} parent=5 // pred_check_branch
        %196 = sbr.rel (%p193) target = $region36
      $region35: #{tpu_custom_call.1} parent=5 // pred_region
        %s197 = ssub.s32 %s17, 1
        %s198 = sand.u32 %s30, 1
        %s199 = scalar_lea.sflag [#allocation3], %s198
        %s200 = sand.u32 %s30, 1
        %s201 = smul.addr %s200, 64
        %s202 = scalar_lea.vmem [#allocation2], %s201
        // Predicated region
        $region37: #{tpu_custom_call.1} parent=35 // pred_check
          %p203 = pneg %p43
        $region38: #{tpu_custom_call.1} parent=35 // pred_check_branch
          %205 = sbr.rel (%p203) target = $region40
        $region39: #{tpu_custom_call.1} parent=35 // pred_region
          %206 = dma.done %s199, 1024
        $region40: #{tpu_custom_call.1} parent=35 // pred_fallthru
          _
        // Predicated region
        $region41: #{tpu_custom_call.1} parent=35 // pred_check
          %p207 = pneg %p64
        $region42: #{tpu_custom_call.1} parent=35 // pred_check_branch
          %209 = sbr.rel (%p207) target = $region44
        $region43: #{tpu_custom_call.1} parent=35 // pred_region
          %210 = dma.done [#allocation6], 512
        $region44: #{tpu_custom_call.1} parent=35 // pred_fallthru
          _
        %s211 = sand.u32 %s30, 1
        %s212 = scalar_lea.sflag [#allocation3], %s211
        %s213 = sand.u32 %s30, 1
        %s214 = smul.addr %s213, 64
        %s215 = scalar_lea.vmem [#allocation2], %s214
        %p216 = pneg %p43
        %p217 = pneg %p40
        %p218 = pneg %p64
        %p219 = pneg %p61
        %p220 = pneg %p85
        %p221 = pneg %p82
        %p222 = pneg %p106
        %p223 = pneg %p103
        %p224 = pneg %p132
        %p225 = pneg %p129
        %s226 = sand.u32 %s119, 1
        %s227 = scalar_lea.sflag [#allocation4], %s226
        %s228 = sand.u32 %s119, 1
        %s229 = smul.addr %s228, 8
        %s230 = scalar_lea.vmem [#allocation7], %s229
        %s231 = smul.u32 8, %s22
        %v232 = vld [vmem:[%s202] sm:$0xff]
        %v233 = vld [vmem:[%s202 + $0x8] sm:$0xff]
        %v234 = vld [vmem:[%s202 + $0x10] sm:$0xff]
        %v235 = vld [vmem:[%s202 + $0x18] sm:$0xff]
        %v236 = vld [vmem:[%s202 + $0x20] sm:$0xff]
        %v237 = vld [vmem:[%s202 + $0x28] sm:$0xff]
        %v238 = vld [vmem:[%s202 + $0x30] sm:$0xff]
        %v239 = vld [vmem:[%s202 + $0x38] sm:$0xff]
        %v240 = vld [vmem:[#allocation5] sm:$0xff]
        %v241 = vld [vmem:[#allocation5 + $0x8] sm:$0xff]
        %v242 = vld [vmem:[#allocation5 + $0x10] sm:$0xff]
        %v243 = vld [vmem:[#allocation5 + $0x18] sm:$0xff]
        %v244 = vld [vmem:[%s2] sm:$0x1]
        %v245 = vld [vmem:[%s3] sm:$0x1]
        %v247 = vlaneseq
        %v248 = vshrl.u32 %v247, 7
        %v249 = vsub.s32 0, %v248
        %v250 = vrot.slane %v244, %v249
        %vm252 = vcmask 261120
        %v254 = vsel %vm252, %v232, 0
        %v257 = vsel %vm252, %v233, 0
        %v260 = vsel %vm252, %v234, 0
        %v263 = vsel %vm252, %v235, 0
        %v266 = vsel %vm252, %v236, 0
        %v269 = vsel %vm252, %v237, 0
        %v272 = vsel %vm252, %v238, 0
        %v275 = vsel %vm252, %v239, 0
        %277 = vmatprep.subr.mxu0 0.0
        %278 = vmatpush1.msra.mxu0 %v240
        %279 = vmatprep.subr.mxu0 0.0
        %280 = vmatpush1.msra.mxu0 %v241
        %281 = vmatprep.subr.mxu0 0.0
        %282 = vmatpush1.msra.mxu0 %v242
        %283 = vmatprep.subr.mxu0 0.0
        %284 = vmatpush1.msra.mxu0 %v243
        %285 = vmatprep.subr.mxu0 0.0
        %286 = vmatpush1.msra.mxu0 0.0
        %287 = vmatprep.subr.mxu0 0.0
        %288 = vmatpush1.msra.mxu0 0.0
        %289 = vmatprep.subr.mxu0 0.0
        %290 = vmatpush1.msra.mxu0 0.0
        %291 = vmatprep.subr.mxu0 0.0
        %292 = vmatpush1.msra.mxu0 0.0
        %293 = vmatprep.subr.mxu0 0.0
        %294 = vmatpush1.msra.mxu0 0.0
        %295 = vmatprep.subr.mxu0 0.0
        %296 = vmatpush1.msra.mxu0 0.0
        %297 = vmatprep.subr.mxu0 0.0
        %298 = vmatpush1.msra.mxu0 0.0
        %299 = vmatprep.subr.mxu0 0.0
        %300 = vmatpush1.msra.mxu0 0.0
        %301 = vmatprep.subr.mxu0 0.0
        %302 = vmatpush1.msra.mxu0 0.0
        %303 = vmatprep.subr.mxu0 0.0
        %304 = vmatpush1.msra.mxu0 0.0
        %305 = vmatprep.subr.mxu0 0.0
        %306 = vmatpush1.msra.mxu0 0.0
        %307 = vmatprep.subr.mxu0 0.0
        %308 = vmatpush1.msra.mxu0 0.0
        %309 = vmatprep.subr.mxu0 0.0
        %310 = vmatpush1.msra.mxu0 0.0
        %311 = vmatprep.subr.mxu0 0.0
        %312 = vmatpush1.msra.mxu0 0.0
        %313 = vmatprep.subr.mxu0 0.0
        %314 = vmatpush1.msra.mxu0 0.0
        %315 = vmatprep.subr.mxu0 0.0
        %316 = vmatpush1.msra.mxu0 0.0
        %317 = vmatprep.subr.mxu0 0.0
        %318 = vmatpush1.msra.mxu0 0.0
        %319 = vmatprep.subr.mxu0 0.0
        %320 = vmatpush1.msra.mxu0 0.0
        %321 = vmatprep.subr.mxu0 0.0
        %322 = vmatpush1.msra.mxu0 0.0
        %323 = vmatprep.subr.mxu0 0.0
        %324 = vmatpush1.msra.mxu0 0.0
        %325 = vmatprep.subr.mxu0 0.0
        %326 = vmatpush1.msra.mxu0 0.0
        %327 = vmatprep.subr.mxu0 0.0
        %328 = vmatpush1.msra.mxu0 0.0
        %329 = vmatprep.subr.mxu0 0.0
        %330 = vmatpush1.msra.mxu0 0.0
        %331 = vmatprep.subr.mxu0 0.0
        %332 = vmatpush1.msra.mxu0 0.0
        %333 = vmatprep.subr.mxu0 0.0
        %334 = vmatpush1.msra.mxu0 0.0
        %335 = vmatprep.subr.mxu0 0.0
        %336 = vmatpush1.msra.mxu0 0.0
        %337 = vmatprep.subr.mxu0 0.0
        %338 = vmatpush1.msra.mxu0 0.0
        %339 = vmatprep.subr.mxu0 0.0
        %340 = vmatpush1.msra.mxu0 0.0
        %341 = vmatprep.mubr.f32.mxu0 0.0
        %342 = vmatmul.mubr.f32.gmra.mrb[0].mxu0 %v254
        %v343 = vpop.f32.mrb[0].mxu0
        %v344 = vadd.f32 %v250, %v343
        %v345 = vpop.f32.mrb[0].mxu0
        %346 = vmatprep.mubr.f32.mxu0 0.0
        %347 = vmatmul.mubr.f32.gmra.mrb[0].mxu0 %v257
        %v348 = vpop.f32.mrb[0].mxu0
        %v349 = vadd.f32 %v250, %v348
        %v350 = vpop.f32.mrb[0].mxu0
        %351 = vmatprep.mubr.f32.mxu0 0.0
        %352 = vmatmul.mubr.f32.gmra.mrb[0].mxu0 %v260
        %v353 = vpop.f32.mrb[0].mxu0
        %v354 = vadd.f32 %v250, %v353
        %v355 = vpop.f32.mrb[0].mxu0
        %356 = vmatprep.mubr.f32.mxu0 0.0
        %357 = vmatmul.mubr.f32.gmra.mrb[0].mxu0 %v263
        %v358 = vpop.f32.mrb[0].mxu0
        %v359 = vadd.f32 %v250, %v358
        %v360 = vpop.f32.mrb[0].mxu0
        %361 = vmatprep.mubr.f32.mxu0 0.0
        %362 = vmatmul.mubr.f32.gmra.mrb[0].mxu0 %v266
        %v363 = vpop.f32.mrb[0].mxu0
        %v364 = vadd.f32 %v250, %v363
        %v365 = vpop.f32.mrb[0].mxu0
        %366 = vmatprep.mubr.f32.mxu0 0.0
        %367 = vmatmul.mubr.f32.gmra.mrb[0].mxu0 %v269
        %v368 = vpop.f32.mrb[0].mxu0
        %v369 = vadd.f32 %v250, %v368
        %v370 = vpop.f32.mrb[0].mxu0
        %371 = vmatprep.mubr.f32.mxu0 0.0
        %372 = vmatmul.mubr.f32.gmra.mrb[0].mxu0 %v272
        %v373 = vpop.f32.mrb[0].mxu0
        %v374 = vadd.f32 %v250, %v373
        %v375 = vpop.f32.mrb[0].mxu0
        %376 = vmatprep.mubr.f32.mxu0 0.0
        %377 = vmatmul.mubr.f32.gmra.mrb[0].mxu0 %v275
        %v378 = vpop.f32.mrb[0].mxu0
        %v379 = vadd.f32 %v250, %v378
        %v380 = vpop.f32.mrb[0].mxu0
        %381 = vdwg.mxu0
        %v382 = vtanh.pop %v344
        %v383 = vtanh.pop %v349
        %v384 = vtanh.pop %v354
        %v385 = vtanh.pop %v359
        %v386 = vtanh.pop %v364
        %v387 = vtanh.pop %v369
        %v388 = vtanh.pop %v374
        %v389 = vtanh.pop %v379
        %v391 = vlaneseq
        %v392 = vshrl.u32 %v391, 7
        %v393 = vsub.s32 0, %v392
        %v394 = vrot.slane %v245, %v393
        %v396 = vmul.f32 %v382, %v394
        %v397 = vmul.f32 %v383, %v394
        %v398 = vmul.f32 %v384, %v394
        %v399 = vmul.f32 %v385, %v394
        %v400 = vmul.f32 %v386, %v394
        %v401 = vmul.f32 %v387, %v394
        %v402 = vmul.f32 %v388, %v394
        %v403 = vmul.f32 %v389, %v394
        %404 = vadd.xlane.f32.xlu0 %v396
        %v405 = vpop.xlane.xlu0 %404
        %406 = vadd.xlane.f32.xlu0 %v397
        %v407 = vpop.xlane.xlu0 %406
        %408 = vadd.xlane.f32.xlu0 %v398
        %v409 = vpop.xlane.xlu0 %408
        %410 = vadd.xlane.f32.xlu0 %v399
        %v411 = vpop.xlane.xlu0 %410
        %412 = vadd.xlane.f32.xlu0 %v400
        %v413 = vpop.xlane.xlu0 %412
        %414 = vadd.xlane.f32.xlu0 %v401
        %v415 = vpop.xlane.xlu0 %414
        %416 = vadd.xlane.f32.xlu0 %v402
        %v417 = vpop.xlane.xlu0 %416
        %418 = vadd.xlane.f32.xlu0 %v403
        %v419 = vpop.xlane.xlu0 %418
        %v420 = vrot.slane %v405, 4
        %v421 = vmax.f32 %v405, %v420
        %v422 = vrot.slane %v421, 2
        %v423 = vmax.f32 %v421, %v422
        %v424 = vrot.slane %v423, 1
        %v425 = vmax.f32 %v423, %v424
        %v426 = vrot.slane %v407, 4
        %v427 = vmax.f32 %v407, %v426
        %v428 = vrot.slane %v427, 2
        %v429 = vmax.f32 %v427, %v428
        %v430 = vrot.slane %v429, 1
        %v431 = vmax.f32 %v429, %v430
        %v432 = vrot.slane %v409, 4
        %v433 = vmax.f32 %v409, %v432
        %v434 = vrot.slane %v433, 2
        %v435 = vmax.f32 %v433, %v434
        %v436 = vrot.slane %v435, 1
        %v437 = vmax.f32 %v435, %v436
        %v438 = vrot.slane %v411, 4
        %v439 = vmax.f32 %v411, %v438
        %v440 = vrot.slane %v439, 2
        %v441 = vmax.f32 %v439, %v440
        %v442 = vrot.slane %v441, 1
        %v443 = vmax.f32 %v441, %v442
        %v444 = vrot.slane %v413, 4
        %v445 = vmax.f32 %v413, %v444
        %v446 = vrot.slane %v445, 2
        %v447 = vmax.f32 %v445, %v446
        %v448 = vrot.slane %v447, 1
        %v449 = vmax.f32 %v447, %v448
        %v450 = vrot.slane %v415, 4
        %v451 = vmax.f32 %v415, %v450
        %v452 = vrot.slane %v451, 2
        %v453 = vmax.f32 %v451, %v452
        %v454 = vrot.slane %v453, 1
        %v455 = vmax.f32 %v453, %v454
        %v456 = vrot.slane %v417, 4
        %v457 = vmax.f32 %v417, %v456
        %v458 = vrot.slane %v457, 2
        %v459 = vmax.f32 %v457, %v458
        %v460 = vrot.slane %v459, 1
        %v461 = vmax.f32 %v459, %v460
        %v462 = vrot.slane %v419, 4
        %v463 = vmax.f32 %v419, %v462
        %v464 = vrot.slane %v463, 2
        %v465 = vmax.f32 %v463, %v464
        %v466 = vrot.slane %v465, 1
        %v467 = vmax.f32 %v465, %v466
        %v468 = vsub.f32 %v405, %v425
        %v469 = vsub.f32 %v407, %v431
        %v470 = vsub.f32 %v409, %v437
        %v471 = vsub.f32 %v411, %v443
        %v472 = vsub.f32 %v413, %v449
        %v473 = vsub.f32 %v415, %v455
        %v474 = vsub.f32 %v417, %v461
        %v475 = vsub.f32 %v419, %v467
        %v476 = vmul.f32 %v468, 1.442695
        %v477 = vpow.pop %v476
        %v478 = vmul.f32 %v469, 1.442695
        %v479 = vpow.pop %v478
        %v480 = vmul.f32 %v470, 1.442695
        %v481 = vpow.pop %v480
        %v482 = vmul.f32 %v471, 1.442695
        %v483 = vpow.pop %v482
        %v484 = vmul.f32 %v472, 1.442695
        %v485 = vpow.pop %v484
        %v486 = vmul.f32 %v473, 1.442695
        %v487 = vpow.pop %v486
        %v488 = vmul.f32 %v474, 1.442695
        %v489 = vpow.pop %v488
        %v490 = vmul.f32 %v475, 1.442695
        %v491 = vpow.pop %v490
        %v492 = vrot.slane %v477, 4
        %v493 = vadd.f32 %v477, %v492
        %v494 = vrot.slane %v493, 2
        %v495 = vadd.f32 %v493, %v494
        %v496 = vrot.slane %v495, 1
        %v497 = vadd.f32 %v495, %v496
        %v498 = vrot.slane %v479, 4
        %v499 = vadd.f32 %v479, %v498
        %v500 = vrot.slane %v499, 2
        %v501 = vadd.f32 %v499, %v500
        %v502 = vrot.slane %v501, 1
        %v503 = vadd.f32 %v501, %v502
        %v504 = vrot.slane %v481, 4
        %v505 = vadd.f32 %v481, %v504
        %v506 = vrot.slane %v505, 2
        %v507 = vadd.f32 %v505, %v506
        %v508 = vrot.slane %v507, 1
        %v509 = vadd.f32 %v507, %v508
        %v510 = vrot.slane %v483, 4
        %v511 = vadd.f32 %v483, %v510
        %v512 = vrot.slane %v511, 2
        %v513 = vadd.f32 %v511, %v512
        %v514 = vrot.slane %v513, 1
        %v515 = vadd.f32 %v513, %v514
        %v516 = vrot.slane %v485, 4
        %v517 = vadd.f32 %v485, %v516
        %v518 = vrot.slane %v517, 2
        %v519 = vadd.f32 %v517, %v518
        %v520 = vrot.slane %v519, 1
        %v521 = vadd.f32 %v519, %v520
        %v522 = vrot.slane %v487, 4
        %v523 = vadd.f32 %v487, %v522
        %v524 = vrot.slane %v523, 2
        %v525 = vadd.f32 %v523, %v524
        %v526 = vrot.slane %v525, 1
        %v527 = vadd.f32 %v525, %v526
        %v528 = vrot.slane %v489, 4
        %v529 = vadd.f32 %v489, %v528
        %v530 = vrot.slane %v529, 2
        %v531 = vadd.f32 %v529, %v530
        %v532 = vrot.slane %v531, 1
        %v533 = vadd.f32 %v531, %v532
        %v534 = vrot.slane %v491, 4
        %v535 = vadd.f32 %v491, %v534
        %v536 = vrot.slane %v535, 2
        %v537 = vadd.f32 %v535, %v536
        %v538 = vrot.slane %v537, 1
        %v539 = vadd.f32 %v537, %v538
        %v540 = vrcp.pop %v497
        %v541 = vmul.f32 %v477, %v540
        %v542 = vrcp.pop %v503
        %v543 = vmul.f32 %v479, %v542
        %v544 = vrcp.pop %v509
        %v545 = vmul.f32 %v481, %v544
        %v546 = vrcp.pop %v515
        %v547 = vmul.f32 %v483, %v546
        %v548 = vrcp.pop %v521
        %v549 = vmul.f32 %v485, %v548
        %v550 = vrcp.pop %v527
        %v551 = vmul.f32 %v487, %v550
        %v552 = vrcp.pop %v533
        %v553 = vmul.f32 %v489, %v552
        %v554 = vrcp.pop %v539
        %v555 = vmul.f32 %v491, %v554
        %v556 = vmul.f32 %v541, %v232
        %v557 = vmul.f32 %v543, %v233
        %v558 = vmul.f32 %v545, %v234
        %v559 = vmul.f32 %v547, %v235
        %v560 = vmul.f32 %v549, %v236
        %v561 = vmul.f32 %v551, %v237
        %v562 = vmul.f32 %v553, %v238
        %v563 = vmul.f32 %v555, %v239
        %v564 = vsel %vm252, %v556, 0.0
        %v565 = vrot.slane %v564, 4
        %v566 = vadd.f32 %v564, %v565
        %v567 = vrot.slane %v566, 2
        %v568 = vadd.f32 %v566, %v567
        %v569 = vrot.slane %v568, 1
        %v570 = vadd.f32 %v568, %v569
        %v571 = vsel %vm252, %v557, 0.0
        %v572 = vrot.slane %v571, 4
        %v573 = vadd.f32 %v571, %v572
        %v574 = vrot.slane %v573, 2
        %v575 = vadd.f32 %v573, %v574
        %v576 = vrot.slane %v575, 1
        %v577 = vadd.f32 %v575, %v576
        %v578 = vsel %vm252, %v558, 0.0
        %v579 = vrot.slane %v578, 4
        %v580 = vadd.f32 %v578, %v579
        %v581 = vrot.slane %v580, 2
        %v582 = vadd.f32 %v580, %v581
        %v583 = vrot.slane %v582, 1
        %v584 = vadd.f32 %v582, %v583
        %v585 = vsel %vm252, %v559, 0.0
        %v586 = vrot.slane %v585, 4
        %v587 = vadd.f32 %v585, %v586
        %v588 = vrot.slane %v587, 2
        %v589 = vadd.f32 %v587, %v588
        %v590 = vrot.slane %v589, 1
        %v591 = vadd.f32 %v589, %v590
        %v592 = vsel %vm252, %v560, 0.0
        %v593 = vrot.slane %v592, 4
        %v594 = vadd.f32 %v592, %v593
        %v595 = vrot.slane %v594, 2
        %v596 = vadd.f32 %v594, %v595
        %v597 = vrot.slane %v596, 1
        %v598 = vadd.f32 %v596, %v597
        %v599 = vsel %vm252, %v561, 0.0
        %v600 = vrot.slane %v599, 4
        %v601 = vadd.f32 %v599, %v600
        %v602 = vrot.slane %v601, 2
        %v603 = vadd.f32 %v601, %v602
        %v604 = vrot.slane %v603, 1
        %v605 = vadd.f32 %v603, %v604
        %v606 = vsel %vm252, %v562, 0.0
        %v607 = vrot.slane %v606, 4
        %v608 = vadd.f32 %v606, %v607
        %v609 = vrot.slane %v608, 2
        %v610 = vadd.f32 %v608, %v609
        %v611 = vrot.slane %v610, 1
        %v612 = vadd.f32 %v610, %v611
        %v613 = vsel %vm252, %v563, 0.0
        %v614 = vrot.slane %v613, 4
        %v615 = vadd.f32 %v613, %v614
        %v616 = vrot.slane %v615, 2
        %v617 = vadd.f32 %v615, %v616
        %v618 = vrot.slane %v617, 1
        %v619 = vadd.f32 %v617, %v618
        %vm628 = vcmask 1041409
        %v629 = vsel %vm628, %v577, %v570
        %vm630 = vcmask 1042434
        %v631 = vsel %vm630, %v584, %v629
        %vm632 = vcmask 1043459
        %v633 = vsel %vm632, %v591, %v631
        %vm634 = vcmask 1044484
        %v635 = vsel %vm634, %v598, %v633
        %vm636 = vcmask 1045509
        %v637 = vsel %vm636, %v605, %v635
        %vm638 = vcmask 1046534
        %v639 = vsel %vm638, %v612, %v637
        %vm640 = vcmask 1047559
        %v641 = vsel %vm640, %v619, %v639
        %643 = vst.msk [vmem:[%s230] sm:$0xff] %vm252, %v641
        %s644 = sand.u32 %s119, 1
        %s645 = scalar_lea.sflag [#allocation4], %s644
        %s646 = sand.u32 %s119, 1
        %s647 = smul.addr %s646, 8
        %s648 = scalar_lea.vmem [#allocation7], %s647
        // Predicated region
        $region45: #{tpu_custom_call.1} parent=35 // pred_check
          %p649 = pneg %p129
        $region46: #{tpu_custom_call.1} parent=35 // pred_check_branch
          %651 = sbr.rel (%p649) target = $region48
        $region47: #{tpu_custom_call.1} parent=35 // pred_region
          %s653 = ssub.s32 128, 128
          %654 = vsyncadd %s645, %s653
          %s655 = smul.addr %s22, 128
          %s656 = scalar_lea.hbm %s4, %s655
          %s658 = sshll.u32 %s648, 4
          %s659 = int_to_ptr.vmem [resolvable:$true] %s658
          %661 = dma.vmem_to_hbm [thread:$0]  %s659, 128, %s656, %s645
        $region48: #{tpu_custom_call.1} parent=35 // pred_fallthru
          _
      $region36: #{tpu_custom_call.1} parent=5 // pred_fallthru
        _
      %p662 = scmp.le.s32.totalorder 2, %s17
      // Predicated region
      $region49: #{tpu_custom_call.1} parent=5 // pred_check
        %p663 = pneg %p662
      $region50: #{tpu_custom_call.1} parent=5 // pred_check_branch
        %665 = sbr.rel (%p663) target = $region52
      $region51: #{tpu_custom_call.1} parent=5 // pred_region
        %s666 = ssub.s32 %s17, 2
        // Predicated region
        $region53: #{tpu_custom_call.1} parent=51 // pred_check
          %p667 = pneg %p135
        $region54: #{tpu_custom_call.1} parent=51 // pred_check_branch
          %669 = sbr.rel (%p667) target = $region56
        $region55: #{tpu_custom_call.1} parent=51 // pred_region
          %s670 = sand.u32 %s120, 1
          %s671 = scalar_lea.sflag [#allocation4], %s670
          %s672 = sand.u32 %s120, 1
          %s673 = smul.addr %s672, 8
          %s674 = scalar_lea.vmem [#allocation7], %s673
          %675 = dma.done %s671, 128
        $region56: #{tpu_custom_call.1} parent=51 // pred_fallthru
          _
      $region52: #{tpu_custom_call.1} parent=5 // pred_fallthru
        _
    $region6: #{tpu_custom_call.1} parent=1 // loop_footer
      %s21 = sadd.s32 1, %s17
    $region7: #{tpu_custom_call.1} parent=1 // loop_footer_branch
      %16 = sbr.rel target = $region3
    $region8: #{tpu_custom_call.1} parent=1 // loop_exit
      _
    %676 = vsyncpa [#allocation3], 1
    %s677 = scalar_lea.sflag [#allocation3], 1
    %678 = vsyncpa %s677, 1
    %679 = vsyncpa [#allocation6], 1
    %680 = vsyncpa [#allocation4], 1
    %s681 = scalar_lea.sflag [#allocation4], 1
    %682 = vsyncpa %s681, 1

</llo_original>
